<compile_context>
chip_gen: v6e
topology: v6e:2x2x1
jax: 0.10.0
libtpu: 0.0.40
codegen_flags: <defaults>
</compile_context>

<pallas_src>
import functools

import jax
import jax.numpy as jnp
from jax.experimental import pallas as pl
from jax.experimental.pallas import tpu as pltpu


def _round_up(n, m):
    return ((n + m - 1) // m) * m


def _disen3head_kernel(x_ref, w_ref, b_ref, o_ref, *, slice_cols):
    # x_ref: (tile_n, x_cols) in x.dtype; w_ref: (w_rows, 3) in x.dtype;
    # b_ref: (1, 3) f32.  One MXU matmul per tile, f32 accumulation.
    x = x_ref[...]
    if slice_cols is not None:
        # Only used when the caller cannot guarantee the dead 4th chunk is
        # finite AND 3d is not lane-aligned (costs a per-step VMEM copy).
        x = x[:, :slice_cols]
    z = jnp.dot(x, w_ref[...], preferred_element_type=jnp.float32) + b_ref[...]
    # NOTE: sigmoid/affine/store run with only 3 of 128 lanes live; a (3, n)
    # transposed-output epilogue would be lane-dense but is second-order here.
    o_ref[...] = (0.05 + 0.35 * jax.nn.sigmoid(z)).astype(o_ref.dtype)


def disen3head_ref(x, weights, biases):
    """Pure-JAX reference mirroring the PyTorch forward."""
    N, in_dim = x.shape
    d = in_dim // 4
    outs = []
    for i in range(3):
        xi = x[:, i * d:(i + 1) * d]                       # hsplit chunk i
        zi = xi @ weights[i].reshape(d, 1).astype(x.dtype) + biases[i]
        outs.append(0.05 + 0.35 * jax.nn.sigmoid(zi))
    return jnp.hstack(outs)


def _vmem_capacity_bytes():
    try:
        return int(pltpu.get_tpu_info().vmem_capacity_bytes)
    except Exception:
        return 64 * 1024 * 1024  # conservative: v7x per-TensorCore VMEM


def disen3head(x, weights, biases, *, min_rows_for_kernel=0, assume_finite=True):
    """weights: (3, in_dim//4) per-head Linear weights; biases: (3,).

    min_rows_for_kernel: production callers (esp. v5e) should set ~1024-2048
      so tiny batches fall back to fused XLA instead of a kernel launch.
    assume_finite: when 3d is not lane-aligned the dead 4th chunk is DMA'd
      anyway and multiplied by zero rows of W (fast path). Set False if that
      chunk may contain NaN/Inf (falls back to an in-kernel column slice).
    """
    N, in_dim = x.shape
    assert in_dim % 4 == 0, "in_dim must be divisible by k=4 (as in torch.hsplit)"
    d = in_dim // 4
    active_cols = 3 * d

    if N < min_rows_for_kernel:
        return disen3head_ref(x, weights, biases)

    itemsize = jnp.dtype(x.dtype).itemsize

    # ---- column layout --------------------------------------------------
    if active_cols % 128 == 0:
        # Lane-aligned: DMA only the 3 live chunks.
        x_cols, w_rows, slice_cols = active_cols, active_cols, None
    elif assume_finite:
        # Full-width DMA; dead chunk hits zero rows of W (no per-step slice).
        x_cols, w_rows, slice_cols = in_dim, in_dim, None
    else:
        # Full-width DMA; drop the dead chunk in-kernel (NaN/Inf safe).
        x_cols, w_rows, slice_cols = in_dim, active_cols, active_cols

    # Block-diagonal packing of the 3 weight vectors, kept in x.dtype so e.g.
    # bf16 inputs hit the MXU at full rate (accumulation stays f32).
    W = jnp.zeros((w_rows, 3), jnp.float32)
    for i in range(3):
        W = W.at[i * d:(i + 1) * d, i].set(weights[i].astype(jnp.float32))
    W = W.astype(x.dtype)
    b = biases.reshape(1, 3).astype(jnp.float32)

    # ---- batch tile sizing (byte-target driven, generation-aware) --------
    vmem_cap = _vmem_capacity_bytes()
    if vmem_cap >= (100 << 20):          # v5e / v6e: 128 MiB physical VMEM
        per_buf_budget = 24 << 20        # per x pipeline buffer
        vmem_ceiling = 96 << 20
    else:                                # v7x: 64 MiB per TensorCore
        per_buf_budget = 16 << 20
        vmem_ceiling = 40 << 20

    rows_from_bytes = max(8, per_buf_budget // max(1, x_cols * itemsize))
    # Keep >= ~8 grid steps for large N so ("parallel",) can feed both v7x
    # TensorCores; ~0.35 us/step makes this a no-op cost on 1-TC chips.
    rows_cap_parallel = _round_up(max(1, pl.cdiv(N, 8)), 8)
    tile_n = min(rows_from_bytes, rows_cap_parallel)
    tile_n = max(8, (tile_n // 8) * 8)
    if tile_n >= N:
        tile_n = N                        # single full-extent block

    grid_steps = pl.cdiv(N, tile_n)       # natural partial last block, no pad
    x_step_bytes = tile_n * x_cols * itemsize

    # Deeper buffering when each step moves little data (tiny in_dim regime).
    use_buf3 = (x_step_bytes < (2 << 20)) and (grid_steps >= 4)
    if use_buf3:
        x_spec = pl.BlockSpec((tile_n, x_cols), lambda i: (i, 0),
                              pipeline_mode=pl.Buffered(3))
    else:
        x_spec = pl.BlockSpec((tile_n, x_cols), lambda i: (i, 0))

    w_itemsize = jnp.dtype(W.dtype).itemsize
    n_x_bufs = 3 if use_buf3 else 2
    vmem_need = (n_x_bufs * x_step_bytes                      # x pipeline bufs
                 + 2 * tile_n * 3 * itemsize                  # out double buffer
                 + 2 * (w_rows * 3 * w_itemsize + 3 * 4)      # W, b
                 + tile_n * 3 * 4                             # f32 z temp
                 + (2 << 20))                                 # headroom
    vmem_limit = int(min(vmem_ceiling, max(16 << 20, vmem_need)))

    cost = pl.CostEstimate(
        flops=2 * N * w_rows * 3,
        transcendentals=N * 3,
        bytes_accessed=int(N * x_cols * itemsize              # x (DMA'd width)
                           + N * 3 * itemsize                 # output
                           + grid_steps * (w_rows * 3 * w_itemsize + 3 * 4)),
    )

    return pl.pallas_call(
        functools.partial(_disen3head_kernel, slice_cols=slice_cols),
        out_shape=jax.ShapeDtypeStruct((N, 3), x.dtype),
        grid=(grid_steps,),
        in_specs=[
            x_spec,                                            # x batch tile
            pl.BlockSpec((w_rows, 3), lambda i: (0, 0)),       # W (resident)
            pl.BlockSpec((1, 3), lambda i: (0, 0)),            # b (resident)
        ],
        out_specs=pl.BlockSpec((tile_n, 3), lambda i: (i, 0)),
        compiler_params=pltpu.CompilerParams(
            dimension_semantics=("parallel",),
            vmem_limit_bytes=vmem_limit),
        cost_estimate=cost,
    )(x, W, b)


if __name__ == "__main__":
    # Small shapes consistent with the module: batch=8, in_dim=32, k=4 -> d=8.
    N, in_dim, k = 8, 32, 4
    d = in_dim // k

    key = jax.random.PRNGKey(0)
    kx, kw, kb = jax.random.split(key, 3)
    x = jax.random.normal(kx, (N, in_dim), dtype=jnp.float32)
    bound = 1.0 / (d ** 0.5)
    weights = jax.random.uniform(kw, (3, d), jnp.float32, -bound, bound)
    biases = jax.random.uniform(kb, (3,), jnp.float32, -bound, bound)

    out = jax.block_until_ready(disen3head(x, weights, biases))
    ref = disen3head_ref(x, weights, biases)
    assert out.shape == (N, 3)
    assert jnp.allclose(out, ref, atol=1e-5, rtol=1e-5)

    # Multi-step grid with a partial last block (N % tile_n != 0, no jnp.pad),
    # zero-row-W full-width path, and Buffered(3) pipelining.
    N2, in_dim2 = 1037, 32
    k2 = jax.random.split(jax.random.PRNGKey(0), 3)
    x2 = jax.random.normal(k2[0], (N2, in_dim2), dtype=jnp.float32)
    w2 = jax.random.uniform(k2[1], (3, in_dim2 // 4), jnp.float32, -0.3, 0.3)
    b2 = jax.random.uniform(k2[2], (3,), jnp.float32, -0.3, 0.3)
    out2 = jax.block_until_ready(disen3head(x2, w2, b2))
    assert out2.shape == (N2, 3)
    assert jnp.allclose(out2, disen3head_ref(x2, w2, b2), atol=1e-5, rtol=1e-5)

    # Lane-aligned narrow-DMA path (3*d % 128 == 0): only live chunks move.
    N3, in_dim3 = 64, 512
    k3 = jax.random.split(jax.random.PRNGKey(1), 3)
    x3 = jax.random.normal(k3[0], (N3, in_dim3), dtype=jnp.float32)
    w3 = jax.random.uniform(k3[1], (3, in_dim3 // 4), jnp.float32, -0.1, 0.1)
    b3 = jax.random.uniform(k3[2], (3,), jnp.float32, -0.1, 0.1)
    out3 = jax.block_until_ready(disen3head(x3, w3, b3))
    assert out3.shape == (N3, 3)
    assert jnp.allclose(out3, disen3head_ref(x3, w3, b3), atol=1e-5, rtol=1e-5)

    # NaN/Inf-safe fallback path (in-kernel slice of the dead 4th chunk).
    x4 = x2.at[:, 3 * (in_dim2 // 4):].set(jnp.nan)
    out4 = jax.block_until_ready(disen3head(x4, w2, b2, assume_finite=False))
    assert out4.shape == (N2, 3)
    assert jnp.allclose(out4, disen3head_ref(x2, w2, b2), atol=1e-5, rtol=1e-5)

    print("KERNEL_OK")
</pallas_src>

<mosaic_0001>
module attributes {stable_mosaic.version = 11 : i64} {
  func.func @_disen3head_kernel(%arg0: i32, %arg1: memref<8x32xf32, #tpu.memory_space<vmem>>, %arg2: memref<32x3xf32, #tpu.memory_space<vmem>>, %arg3: memref<1x3xf32, #tpu.memory_space<vmem>>, %arg4: memref<8x3xf32, #tpu.memory_space<vmem>>) attributes {dimension_semantics = [#tpu.dimension_semantics<parallel>], iteration_bounds = array<i64: 1>, scalar_prefetch = 0 : i64, scratch_operands = 0 : i64, tpu.core_type = #tpu.core_type<tc>, window_params = [{transform_indices = @transform_0, window_bounds = array<i64: 8, 32>}, {pipeline_mode = #tpu.pipeline_mode<synchronous>, transform_indices = @transform_1, window_bounds = array<i64: 32, 3>}, {pipeline_mode = #tpu.pipeline_mode<synchronous>, transform_indices = @transform_2, window_bounds = array<i64: 1, 3>}, {transform_indices = @transform_3, window_bounds = array<i64: 8, 3>}]} {
    %c0 = arith.constant 0 : index
    %c0_0 = arith.constant 0 : index
    %0 = vector.load %arg1[%c0, %c0_0] : memref<8x32xf32, #tpu.memory_space<vmem>>, vector<8x32xf32>
    %c0_1 = arith.constant 0 : index
    %c0_2 = arith.constant 0 : index
    %1 = vector.load %arg2[%c0_1, %c0_2] : memref<32x3xf32, #tpu.memory_space<vmem>>, vector<32x3xf32>
    %cst = arith.constant dense<0.000000e+00> : vector<8x3xf32>
    %2 = tpu.matmul %0, %1, %cst {dimension_numbers = #tpu.dot_dimension_numbers<[1], [0], [0], [1], [0, 0, 1, 1], [], []>} : vector<8x32xf32>, vector<32x3xf32>, vector<8x3xf32> -> vector<8x3xf32>
    %c0_3 = arith.constant 0 : index
    %c0_4 = arith.constant 0 : index
    %3 = vector.load %arg3[%c0_3, %c0_4] : memref<1x3xf32, #tpu.memory_space<vmem>>, vector<1x3xf32>
    %4 = vector.broadcast %3 : vector<1x3xf32> to vector<8x3xf32>
    %5 = arith.addf %2, %4 : vector<8x3xf32>
    %6 = arith.negf %5 : vector<8x3xf32>
    %7 = math.exp %6 : vector<8x3xf32>
    %cst_5 = arith.constant 1.000000e+00 : f32
    %8 = vector.broadcast %cst_5 : f32 to vector<8x3xf32>
    %9 = arith.addf %8, %7 : vector<8x3xf32>
    %10 = arith.divf %8, %9 : vector<8x3xf32>
    %cst_6 = arith.constant 3.500000e-01 : f32
    %11 = vector.broadcast %cst_6 : f32 to vector<8x3xf32>
    %12 = arith.mulf %11, %10 : vector<8x3xf32>
    %cst_7 = arith.constant 5.000000e-02 : f32
    %13 = vector.broadcast %cst_7 : f32 to vector<8x3xf32>
    %14 = arith.addf %13, %12 : vector<8x3xf32>
    %c0_8 = arith.constant 0 : index
    %c0_9 = arith.constant 0 : index
    %15 = vector.load %arg4[%c0_8, %c0_9] : memref<8x3xf32, #tpu.memory_space<vmem>>, vector<8x3xf32>
    tpu.vector_store %arg4[%c0_8, %c0_9], %14 {strides = array<i32>} : memref<8x3xf32, #tpu.memory_space<vmem>>, vector<8x3xf32>,
    return
  }
  func.func @transform_0(%arg0: i32) -> (i32, i32) {
    %c0_i32 = arith.constant 0 : i32
    %c0_i32_0 = arith.constant 0 : i32
    return %arg0, %c0_i32 : i32, i32
  }
  func.func @transform_1(%arg0: i32) -> (i32, i32) {
    %c0_i32 = arith.constant 0 : i32
    %c0_i32_0 = arith.constant 0 : i32
    %c0_i32_1 = arith.constant 0 : i32
    return %c0_i32, %c0_i32_0 : i32, i32
  }
  func.func @transform_2(%arg0: i32) -> (i32, i32) {
    %c0_i32 = arith.constant 0 : i32
    %c0_i32_0 = arith.constant 0 : i32
    %c0_i32_1 = arith.constant 0 : i32
    return %c0_i32, %c0_i32_0 : i32, i32
  }
  func.func @transform_3(%arg0: i32) -> (i32, i32) {
    %c0_i32 = arith.constant 0 : i32
    %c0_i32_0 = arith.constant 0 : i32
    return %arg0, %c0_i32 : i32, i32
  }
}

</mosaic_0001>

<llo_original>
// kernel: tpu_custom_call.1
$region0: #{tpu_custom_call.1}
  #allocation0 [shape = 'u32[]', space=smem, size = 0x4, offset = 0x4, fixed_abs, tag = 'smem constant byte address 0x4 - core index']
  #allocation1 [shape = 'u32[144,128]{1,0:T(1,128)}', space=vmem, size = 0x12000, scoped, tag = 'internal scratch']
  %s0 = inlined_call_operand.vmem [shape: f32[8,32], index: 0, kind: input, shape index: {}]
  %s1 = inlined_call_operand.vmem [shape: f32[32,3], index: 1, kind: input, shape index: {}]
  %s2 = inlined_call_operand.vmem [shape: f32[1,3], index: 2, kind: input, shape index: {}]
  %s3 = inlined_call_operand.vmem [shape: f32[8,3], index: 3, kind: output, shape index: {}]
  %s4 = sld [smem:[#allocation0]]
  $region22: #{tpu_custom_call.1} parent=0
    _
  %s6 = ssub.s32 1, %s4
  %s7 = scalar_select 0, %s6, %s4
  // Predicated region
  $region2: #{tpu_custom_call.1} parent=0 // pred_check
    _
  $region3: #{tpu_custom_call.1} parent=0 // pred_check_branch
    %9 = sbr.rel (0) target = $region5
  $region4: #{tpu_custom_call.1} parent=0 // pred_region
    _
  $region5: #{tpu_custom_call.1} parent=0 // pred_fallthru
    _
  // Predicated region
  $region6: #{tpu_custom_call.1} parent=0 // pred_check
    _
  $region7: #{tpu_custom_call.1} parent=0 // pred_check_branch
    %11 = sbr.rel (0) target = $region9
  $region8: #{tpu_custom_call.1} parent=0 // pred_region
    _
  $region9: #{tpu_custom_call.1} parent=0 // pred_fallthru
    _
  // Predicated region
  $region10: #{tpu_custom_call.1} parent=0 // pred_check
    _
  $region11: #{tpu_custom_call.1} parent=0 // pred_check_branch
    %13 = sbr.rel (0) target = $region13
  $region12: #{tpu_custom_call.1} parent=0 // pred_region
    _
  $region13: #{tpu_custom_call.1} parent=0 // pred_fallthru
    _
  %v14 = vld [vmem:[%s0] sm:$0xff]
  %v15 = vld [vmem:[%s1] sm:$0xff]
  %v16 = vld [vmem:[%s1 + $0x8] sm:$0xff]
  %v17 = vld [vmem:[%s1 + $0x10] sm:$0xff]
  %v18 = vld [vmem:[%s1 + $0x18] sm:$0xff]
  %v19 = vld [vmem:[%s2] sm:$0x1]
  %v21 = vlaneseq
  %v22 = vshrl.u32 %v21, 7
  %v23 = vsub.s32 0, %v22
  %v24 = vrot.slane %v19, %v23
  %vm26 = vcmask 261120
  %v28 = vsel %vm26, %v14, 0
  %30 = vmatprep.subr.mxu0 0.0
  %31 = vmatpush1.msra.mxu0 0.0
  %32 = vmatprep.subr.mxu0 0.0
  %33 = vmatpush1.msra.mxu0 0.0
  %34 = vmatprep.subr.mxu0 0.0
  %35 = vmatpush1.msra.mxu0 0.0
  %36 = vmatprep.subr.mxu0 0.0
  %37 = vmatpush1.msra.mxu0 0.0
  %38 = vmatprep.subr.mxu0 0.0
  %39 = vmatpush1.msra.mxu0 0.0
  %40 = vmatprep.subr.mxu0 0.0
  %41 = vmatpush1.msra.mxu0 0.0
  %42 = vmatprep.subr.mxu0 0.0
  %43 = vmatpush1.msra.mxu0 0.0
  %44 = vmatprep.subr.mxu0 0.0
  %45 = vmatpush1.msra.mxu0 0.0
  %46 = vmatprep.subr.mxu0 0.0
  %47 = vmatpush1.msra.mxu0 0.0
  %48 = vmatprep.subr.mxu0 0.0
  %49 = vmatpush1.msra.mxu0 0.0
  %50 = vmatprep.subr.mxu0 0.0
  %51 = vmatpush1.msra.mxu0 0.0
  %52 = vmatprep.subr.mxu0 0.0
  %53 = vmatpush1.msra.mxu0 0.0
  %54 = vmatprep.subr.mxu0 0.0
  %55 = vmatpush1.msra.mxu0 %v18
  %56 = vmatprep.subr.mxu0 0.0
  %57 = vmatpush1.msra.mxu0 %v17
  %58 = vmatprep.subr.mxu0 0.0
  %59 = vmatpush1.msra.mxu0 %v16
  %60 = vmatprep.subr.mxu0 0.0
  %61 = vmatpush1.msra.mxu0 %v15
  %62 = vmatprep.subr.mxu0 0.0
  %63 = vmatpush2.msra.mxu0 0.0
  %64 = vmatprep.subr.mxu0 0.0
  %65 = vmatpush2.msra.mxu0 0.0
  %66 = vmatprep.subr.mxu0 0.0
  %67 = vmatpush2.msra.mxu0 0.0
  %68 = vmatprep.subr.mxu0 0.0
  %69 = vmatpush2.msra.mxu0 0.0
  %70 = vmatprep.subr.mxu0 0.0
  %71 = vmatpush2.msra.mxu0 0.0
  %72 = vmatprep.subr.mxu0 0.0
  %73 = vmatpush2.msra.mxu0 0.0
  %74 = vmatprep.subr.mxu0 0.0
  %75 = vmatpush2.msra.mxu0 0.0
  %76 = vmatprep.subr.mxu0 0.0
  %77 = vmatpush2.msra.mxu0 0.0
  %78 = vmatprep.subr.mxu0 0.0
  %79 = vmatpush2.msra.mxu0 0.0
  %80 = vmatprep.subr.mxu0 0.0
  %81 = vmatpush2.msra.mxu0 0.0
  %82 = vmatprep.subr.mxu0 0.0
  %83 = vmatpush2.msra.mxu0 0.0
  %84 = vmatprep.subr.mxu0 0.0
  %85 = vmatpush2.msra.mxu0 0.0
  %86 = vmatprep.subr.mxu0 0.0
  %87 = vmatpush2.msra.mxu0 0.0
  %88 = vmatprep.subr.mxu0 0.0
  %89 = vmatpush2.msra.mxu0 0.0
  %90 = vmatprep.subr.mxu0 0.0
  %91 = vmatpush2.msra.mxu0 0.0
  %92 = vmatprep.subr.mxu0 0.0
  %93 = vmatpush2.msra.mxu0 0.0
  %94 = vmatprep.mubr.f32.mxu0 0.0
  %95 = vmatmul.mubr.f32.gmra.mxu0 %v28
  %v96 = vpop.f32.mrf.mxu0
  %v97 = vadd.f32 %v24, %v96
  %v98 = vpop.f32.mrf.mxu0
  %99 = vdwg.mxu0
  %v100 = vxor.u32 %v97, 2147483648
  %v101 = vmul.f32 %v100, 1.442695
  %v102 = vpow.pop %v101
  %v103 = vadd.f32 %v102, 1.0
  %v104 = vrcp.pop %v103
  %v105 = vmul.f32 1.0, %v104
  %v106 = vmul.f32 %v105, 0.35
  %v107 = vadd.f32 %v106, 0.05
  %vm108 = vcmask 23552
  %109 = vst.msk [vmem:[%s3] sm:$0xff] %vm108, %v107
  // Predicated region
  $region14: #{tpu_custom_call.1} parent=0 // pred_check
    _
  $region15: #{tpu_custom_call.1} parent=0 // pred_check_branch
    %111 = sbr.rel (0) target = $region17
  $region16: #{tpu_custom_call.1} parent=0 // pred_region
    _
  $region17: #{tpu_custom_call.1} parent=0 // pred_fallthru
    _
  // Predicated region
  $region18: #{tpu_custom_call.1} parent=0 // pred_check
    _
  $region19: #{tpu_custom_call.1} parent=0 // pred_check_branch
    %113 = sbr.rel (0) target = $region21
  $region20: #{tpu_custom_call.1} parent=0 // pred_region
    _
  $region21: #{tpu_custom_call.1} parent=0 // pred_fallthru
    _

</llo_original>
